<compile_context>
chip_gen: v7x
topology: tpu7x:2x2x1
jax: 0.10.0
libtpu: 0.0.40
codegen_flags: <defaults>
</compile_context>

<pallas_src>
import functools
import numpy as np
import jax
import jax.numpy as jnp
from jax import lax
from jax.experimental import pallas as pl
from jax.experimental.pallas import tpu as pltpu


# ----------------------------- Pallas kernels ------------------------------ #

def se_attention_kernel(pooled_ref, w1_ref, w2_ref, b2_ref, attn_ref, *, temperature):
    """SEModule head on the pooled tensor: fc1 -> relu -> fc2(+b) -> softmax(/T).

    pooled_ref: (B, C)   w1_ref: (C, hidden)   w2_ref: (hidden, K)
    b2_ref    : (1, K)   attn_ref out: (B, K)
    """
    h = jnp.dot(pooled_ref[...], w1_ref[...], preferred_element_type=jnp.float32)
    h = jnp.maximum(h, 0.0)                                                # relu
    logits = jnp.dot(h, w2_ref[...], preferred_element_type=jnp.float32)
    logits = logits + b2_ref[...]                                          # (B, K)
    z = logits * (1.0 / temperature)
    z = z - jnp.max(z, axis=1, keepdims=True)
    e = jnp.exp(z)
    attn_ref[...] = (e / jnp.sum(e, axis=1, keepdims=True)).astype(attn_ref.dtype)


def dyconv_kernel(wf_ref, patch_ref, bias_ref, out_ref):
    """Per (batch, P-tile): attention-folded conv as a single MXU matmul.

    wf_ref   : (1, O, Ckk)     bf16  (attention-folded filters, resident over p)
    patch_ref: (1, Ckk, TP)    bf16  (im2col patches, P on the lane axis)
    bias_ref : (1, O, 1)       f32   (attention-folded bias)
    out_ref  : (1, O, TP)      f32   (lane-dense stores: last dim = TP)
    """
    acc = jnp.dot(wf_ref[0], patch_ref[0], preferred_element_type=jnp.float32)
    out_ref[0] = (acc + bias_ref[0]).astype(out_ref.dtype)


# --------------------------------- wrapper --------------------------------- #

def _pick_tile_p(P):
    """Largest P tile <= 512 that is a multiple of 128 and divides P."""
    for cand in (512, 384, 256, 128):
        if P % cand == 0:
            return cand
    return P  # fall back to full-extent block (exempt from the 128 rule)


def dyconv2d_forward(x, params, *, kernel_size, stride, padding, dilation, K,
                     out_planes, temperature):
    w1, w2, b2 = params["w1"], params["w2"], params["b2"]
    weight, bias = params["weight"], params["bias"]

    B, C, H, W = x.shape
    kk = kernel_size
    H_out = (H + 2 * padding - dilation * (kk - 1) - 1) // stride + 1
    W_out = (W + 2 * padding - dilation * (kk - 1) - 1) // stride + 1
    P = H_out * W_out
    Ckk = C * kk * kk
    O = out_planes

    # ---- SE attention: pooling in XLA (no transposed copy of x), tiny FC
    #      head in a Pallas kernel on the (B, C) pooled tensor ----
    pooled = jnp.mean(x, axis=(2, 3)).astype(jnp.float32)                  # (B, C)
    attention = pl.pallas_call(
        functools.partial(se_attention_kernel, temperature=float(temperature)),
        out_shape=jax.ShapeDtypeStruct((B, K), jnp.float32),
    )(pooled, w1.T.astype(jnp.float32), w2.T.astype(jnp.float32),
      b2.reshape(1, K).astype(jnp.float32))

    # ---- fold attention into the expert filter bank (tiny, plain JAX) ----
    # weight: (K*O, C, k, k) -> (K, O, Ckk) with Ckk ordered (c, kh, kw)
    weight_r = weight.reshape(K, O, Ckk).astype(jnp.float32)
    w_fold = jnp.einsum("bk,koc->boc", attention, weight_r)                # (B, O, Ckk)
    b_fold = (attention @ bias.reshape(K, O).astype(jnp.float32))          # (B, O)
    b_fold = b_fold[..., None]                                             # (B, O, 1)

    # ---- im2col (glue, plain JAX); produces (B, Ckk, P) directly so the
    #      kernel output can keep P on the lane axis ----
    x_pad = jnp.pad(x, ((0, 0), (0, 0), (padding, padding), (padding, padding)))
    cols = []
    for kh in range(kk):
        for kw in range(kk):
            hs, ws = kh * dilation, kw * dilation
            cols.append(
                x_pad[:, :, hs:hs + (H_out - 1) * stride + 1:stride,
                      ws:ws + (W_out - 1) * stride + 1:stride])
    cols = jnp.stack(cols, axis=2)                      # (B, C, k*k, H_out, W_out)
    patches = cols.reshape(B, Ckk, P).astype(jnp.bfloat16)                 # (B, Ckk, P)
    w_fold_bf = w_fold.astype(jnp.bfloat16)

    # ---- main dynamic-conv kernel: grid over (batch, P-tiles) ----
    tile_P = _pick_tile_p(P)
    n_p = P // tile_P

    grid_spec = pltpu.PrefetchScalarGridSpec(
        num_scalar_prefetch=0,
        grid=(B, n_p),
        in_specs=[
            pl.BlockSpec((1, O, Ckk), lambda b, p: (b, 0, 0)),     # folded filters
            pl.BlockSpec((1, Ckk, tile_P), lambda b, p: (b, 0, p)),  # patches tile
            pl.BlockSpec((1, O, 1), lambda b, p: (b, 0, 0)),       # folded bias
        ],
        out_specs=pl.BlockSpec((1, O, tile_P), lambda b, p: (b, 0, p)),
    )

    # VMEM budget: double-buffered inputs/outputs for one (b, p) step + headroom.
    step_bytes = 2 * (Ckk * tile_P * 2 + O * Ckk * 2 + O * 4 + O * tile_P * 4)
    vmem_limit = int(min(32 * 1024 * 1024, max(4 * 1024 * 1024, 4 * step_bytes)))

    cost = pl.CostEstimate(
        flops=2 * B * O * Ckk * P,
        transcendentals=0,
        bytes_accessed=(B * Ckk * P * 2 + B * O * Ckk * 2 + B * O * 4 + B * O * P * 4),
    )

    out = pl.pallas_call(
        dyconv_kernel,
        grid_spec=grid_spec,
        out_shape=jax.ShapeDtypeStruct((B, O, P), jnp.float32),
        compiler_params=pltpu.CompilerParams(
            dimension_semantics=("parallel", "parallel"),
            vmem_limit_bytes=vmem_limit),
        cost_estimate=cost,
    )(w_fold_bf, patches, b_fold)

    # (B, O, P) -> NCHW is a pure reshape (no transpose needed).
    return out.reshape(B, O, H_out, W_out)


# ------------------------------ reference (JAX) ----------------------------- #

def reference_forward(x, params, *, kernel_size, stride, padding, dilation, K,
                      out_planes, temperature):
    w1, w2, b2 = params["w1"], params["w2"], params["b2"]
    weight, bias = params["weight"], params["bias"]
    B = x.shape[0]
    pooled = x.mean(axis=(2, 3))
    h = jax.nn.relu(pooled @ w1.T)
    logits = h @ w2.T + b2
    att = jax.nn.softmax(logits / temperature, axis=1)
    conv = lax.conv_general_dilated(
        x, weight, (stride, stride), ((padding, padding), (padding, padding)),
        rhs_dilation=(dilation, dilation),
        dimension_numbers=("NCHW", "OIHW", "NCHW"))
    conv = conv + bias[None, :, None, None]
    Hout, Wout = conv.shape[2], conv.shape[3]
    out = conv.reshape(B, K, out_planes * Hout * Wout)
    return jnp.einsum("bk,bkm->bm", att, out).reshape(B, out_planes, Hout, Wout)


# ----------------------------------- main ----------------------------------- #

if __name__ == "__main__":
    # Module hyper-parameters (groups == 1, training-mode forward)
    in_planes, out_planes, kernel_size = 4, 8, 3
    ratio, stride, padding, dilation = 0.25, 1, 1, 1
    K, temperature = 4, 30
    B, H, W = 2, 16, 16

    hidden = int(in_planes * ratio) + 1       # SEModule hidden_planes
    key = jax.random.PRNGKey(0)
    k1, k2, k3, k4, k5 = jax.random.split(key, 5)

    # Deterministic parameter init (shapes from __init__)
    w1 = jax.random.normal(k1, (hidden, in_planes), jnp.float32) * np.sqrt(2.0 / hidden)
    w2 = jax.random.normal(k2, (K, hidden), jnp.float32) * np.sqrt(2.0 / K)
    b2 = jnp.zeros((K,), jnp.float32)
    he_std = np.sqrt(2.0) * (in_planes * kernel_size ** 2) ** (-0.5)
    weight = jax.random.normal(
        k3, (K * out_planes, in_planes, kernel_size, kernel_size), jnp.float32) * he_std
    bias = jax.random.normal(k4, (K * out_planes,), jnp.float32) * 0.1
    params = dict(w1=w1, w2=w2, b2=b2, weight=weight, bias=bias)

    x = jax.random.normal(k5, (B, in_planes, H, W), jnp.float32)

    hp = dict(kernel_size=kernel_size, stride=stride, padding=padding,
              dilation=dilation, K=K, out_planes=out_planes,
              temperature=temperature)

    out = dyconv2d_forward(x, params, **hp)
    out = jax.block_until_ready(out)

    ref = jax.block_until_ready(reference_forward(x, params, **hp))
    assert out.shape == (B, out_planes, H, W)
    # bf16 matmul inputs (f32 accumulation) -> slightly looser tolerance vs f32 ref.
    assert np.allclose(np.asarray(out), np.asarray(ref), atol=2e-2, rtol=2e-2)

    print("KERNEL_OK")
</pallas_src>

<mosaic_0001>
module attributes {stable_mosaic.version = 11 : i64} {
  func.func @se_attention_kernel(%arg0: memref<2x4xf32, #tpu.memory_space<vmem>>, %arg1: memref<4x2xf32, #tpu.memory_space<vmem>>, %arg2: memref<2x4xf32, #tpu.memory_space<vmem>>, %arg3: memref<1x4xf32, #tpu.memory_space<vmem>>, %arg4: memref<2x4xf32, #tpu.memory_space<vmem>>) attributes {dimension_semantics = [], scalar_prefetch = 0 : i64, scratch_operands = 0 : i64, tpu.core_type = #tpu.core_type<tc>} {
    %c0 = arith.constant 0 : index
    %c0_0 = arith.constant 0 : index
    %0 = vector.load %arg0[%c0, %c0_0] : memref<2x4xf32, #tpu.memory_space<vmem>>, vector<2x4xf32>
    %c0_1 = arith.constant 0 : index
    %c0_2 = arith.constant 0 : index
    %1 = vector.load %arg1[%c0_1, %c0_2] : memref<4x2xf32, #tpu.memory_space<vmem>>, vector<4x2xf32>
    %cst = arith.constant dense<0.000000e+00> : vector<2x2xf32>
    %2 = tpu.matmul %0, %1, %cst {dimension_numbers = #tpu.dot_dimension_numbers<[1], [0], [0], [1], [0, 0, 1, 1], [], []>} : vector<2x4xf32>, vector<4x2xf32>, vector<2x2xf32> -> vector<2x2xf32>
    %cst_3 = arith.constant 0.000000e+00 : f32
    %3 = vector.broadcast %cst_3 : f32 to vector<2x2xf32>
    %4 = arith.maximumf %2, %3 : vector<2x2xf32>
    %c0_4 = arith.constant 0 : index
    %c0_5 = arith.constant 0 : index
    %5 = vector.load %arg2[%c0_4, %c0_5] : memref<2x4xf32, #tpu.memory_space<vmem>>, vector<2x4xf32>
    %cst_6 = arith.constant dense<0.000000e+00> : vector<2x4xf32>
    %6 = tpu.matmul %4, %5, %cst_6 {dimension_numbers = #tpu.dot_dimension_numbers<[1], [0], [0], [1], [0, 0, 1, 1], [], []>} : vector<2x2xf32>, vector<2x4xf32>, vector<2x4xf32> -> vector<2x4xf32>
    %c0_7 = arith.constant 0 : index
    %c0_8 = arith.constant 0 : index
    %7 = vector.load %arg3[%c0_7, %c0_8] : memref<1x4xf32, #tpu.memory_space<vmem>>, vector<1x4xf32>
    %8 = vector.broadcast %7 : vector<1x4xf32> to vector<2x4xf32>
    %9 = arith.addf %6, %8 : vector<2x4xf32>
    %cst_9 = arith.constant 0.0333333351 : f32
    %10 = vector.broadcast %cst_9 : f32 to vector<2x4xf32>
    %11 = arith.mulf %9, %10 : vector<2x4xf32>
    %cst_10 = arith.constant dense<0xFF800000> : vector<2xf32>
    %12 = vector.multi_reduction <maximumf>, %11, %cst_10 [1] : vector<2x4xf32> to vector<2xf32>
    %13 = vector.shape_cast %12 : vector<2xf32> to vector<2x1xf32>
    %14 = vector.broadcast %13 : vector<2x1xf32> to vector<2x4xf32>
    %15 = arith.subf %11, %14 : vector<2x4xf32>
    %16 = math.exp %15 : vector<2x4xf32>
    %cst_11 = arith.constant dense<0.000000e+00> : vector<2xf32>
    %17 = vector.multi_reduction <add>, %16, %cst_11 [1] : vector<2x4xf32> to vector<2xf32>
    %18 = vector.shape_cast %17 : vector<2xf32> to vector<2x1xf32>
    %19 = vector.broadcast %18 : vector<2x1xf32> to vector<2x4xf32>
    %20 = arith.divf %16, %19 : vector<2x4xf32>
    %c0_12 = arith.constant 0 : index
    %c0_13 = arith.constant 0 : index
    %21 = vector.load %arg4[%c0_12, %c0_13] : memref<2x4xf32, #tpu.memory_space<vmem>>, vector<2x4xf32>
    tpu.vector_store %arg4[%c0_12, %c0_13], %20 {strides = array<i32>} : memref<2x4xf32, #tpu.memory_space<vmem>>, vector<2x4xf32>,
    return
  }
}

</mosaic_0001>

<llo_original>
// kernel: tpu_custom_call.1
$region0: #{tpu_custom_call.1}
  #allocation0 [shape = 'u32[]', space=smem, size = 0x4, offset = 0x4, fixed_abs, tag = 'smem constant byte address 0x4 - core index']
  #allocation1 [shape = 'u32[144,128]{1,0:T(1,128)}', space=vmem, size = 0x12000, scoped, tag = 'internal scratch']
  %s0 = inlined_call_operand.vmem [shape: f32[2,4], index: 0, kind: input, shape index: {}]
  %s1 = inlined_call_operand.vmem [shape: f32[4,2], index: 1, kind: input, shape index: {}]
  %s2 = inlined_call_operand.vmem [shape: f32[2,4], index: 2, kind: input, shape index: {}]
  %s3 = inlined_call_operand.vmem [shape: f32[1,4], index: 3, kind: input, shape index: {}]
  %s4 = inlined_call_operand.hbm [shape: f32[2,4], index: 4, kind: output, shape index: {}]
  %s5 = sld [smem:[#allocation0]]
  $region26: #{tpu_custom_call.1} parent=0
    _
  %s7 = ssub.s32 1, %s5
  %s8 = scalar_select 0, %s7, %s5
  $region1: #{tpu_custom_call.1} parent=0
    #allocation2 [shape = 'u8[1024]{0}', space=vmem, size = 0x400, scoped, tag = 'output window, operand 0, single buffered']
    #allocation3 [shape = 's32[1]{0}', space=sflag, size = 0x4, scoped, tag = 'scoped memory for tpu_custom_call.1']
    %9 = vsyncpa [#allocation3], 0
    // Predicated region
    $region2: #{tpu_custom_call.1} parent=1 // pred_check
      _
    $region3: #{tpu_custom_call.1} parent=1 // pred_check_branch
      %11 = sbr.rel (0) target = $region5
    $region4: #{tpu_custom_call.1} parent=1 // pred_region
      _
    $region5: #{tpu_custom_call.1} parent=1 // pred_fallthru
      _
    // Predicated region
    $region6: #{tpu_custom_call.1} parent=1 // pred_check
      _
    $region7: #{tpu_custom_call.1} parent=1 // pred_check_branch
      %13 = sbr.rel (0) target = $region9
    $region8: #{tpu_custom_call.1} parent=1 // pred_region
      _
    $region9: #{tpu_custom_call.1} parent=1 // pred_fallthru
      _
    // Predicated region
    $region10: #{tpu_custom_call.1} parent=1 // pred_check
      _
    $region11: #{tpu_custom_call.1} parent=1 // pred_check_branch
      %15 = sbr.rel (0) target = $region13
    $region12: #{tpu_custom_call.1} parent=1 // pred_region
      _
    $region13: #{tpu_custom_call.1} parent=1 // pred_fallthru
      _
    // Predicated region
    $region14: #{tpu_custom_call.1} parent=1 // pred_check
      _
    $region15: #{tpu_custom_call.1} parent=1 // pred_check_branch
      %17 = sbr.rel (0) target = $region17
    $region16: #{tpu_custom_call.1} parent=1 // pred_region
      _
    $region17: #{tpu_custom_call.1} parent=1 // pred_fallthru
      _
    %v18 = vld [vmem:[%s0] sm:$0x3]
    %v19 = vld [vmem:[%s1] sm:$0xf]
    %vm20 = vcmask 31744
    %v22 = vsel %vm20, %v18, 0
    %vm24 = vcmask 1043456
    %v26 = vsel %vm24, %v19, 0
    %28 = vmatprep.subr.mxu0 0.0
    %29 = vmatpush1.msra.mxu0 %v26
    %30 = vmatprep.subr.mxu0 0.0
    %31 = vmatpush1.msra.mxu0 0.0
    %32 = vmatprep.subr.mxu0 0.0
    %33 = vmatpush1.msra.mxu0 0.0
    %34 = vmatprep.subr.mxu0 0.0
    %35 = vmatpush1.msra.mxu0 0.0
    %36 = vmatprep.subr.mxu0 0.0
    %37 = vmatpush1.msra.mxu0 0.0
    %38 = vmatprep.subr.mxu0 0.0
    %39 = vmatpush1.msra.mxu0 0.0
    %40 = vmatprep.subr.mxu0 0.0
    %41 = vmatpush1.msra.mxu0 0.0
    %42 = vmatprep.subr.mxu0 0.0
    %43 = vmatpush1.msra.mxu0 0.0
    %44 = vmatprep.subr.mxu0 0.0
    %45 = vmatpush1.msra.mxu0 0.0
    %46 = vmatprep.subr.mxu0 0.0
    %47 = vmatpush1.msra.mxu0 0.0
    %48 = vmatprep.subr.mxu0 0.0
    %49 = vmatpush1.msra.mxu0 0.0
    %50 = vmatprep.subr.mxu0 0.0
    %51 = vmatpush1.msra.mxu0 0.0
    %52 = vmatprep.subr.mxu0 0.0
    %53 = vmatpush1.msra.mxu0 0.0
    %54 = vmatprep.subr.mxu0 0.0
    %55 = vmatpush1.msra.mxu0 0.0
    %56 = vmatprep.subr.mxu0 0.0
    %57 = vmatpush1.msra.mxu0 0.0
    %58 = vmatprep.subr.mxu0 0.0
    %59 = vmatpush1.msra.mxu0 0.0
    %60 = vmatprep.subr.mxu0 0.0
    %61 = vmatpush1.msra.mxu0 0.0
    %62 = vmatprep.subr.mxu0 0.0
    %63 = vmatpush1.msra.mxu0 0.0
    %64 = vmatprep.subr.mxu0 0.0
    %65 = vmatpush1.msra.mxu0 0.0
    %66 = vmatprep.subr.mxu0 0.0
    %67 = vmatpush1.msra.mxu0 0.0
    %68 = vmatprep.subr.mxu0 0.0
    %69 = vmatpush1.msra.mxu0 0.0
    %70 = vmatprep.subr.mxu0 0.0
    %71 = vmatpush1.msra.mxu0 0.0
    %72 = vmatprep.subr.mxu0 0.0
    %73 = vmatpush1.msra.mxu0 0.0
    %74 = vmatprep.subr.mxu0 0.0
    %75 = vmatpush1.msra.mxu0 0.0
    %76 = vmatprep.subr.mxu0 0.0
    %77 = vmatpush1.msra.mxu0 0.0
    %78 = vmatprep.subr.mxu0 0.0
    %79 = vmatpush1.msra.mxu0 0.0
    %80 = vmatprep.subr.mxu0 0.0
    %81 = vmatpush1.msra.mxu0 0.0
    %82 = vmatprep.subr.mxu0 0.0
    %83 = vmatpush1.msra.mxu0 0.0
    %84 = vmatprep.subr.mxu0 0.0
    %85 = vmatpush1.msra.mxu0 0.0
    %86 = vmatprep.subr.mxu0 0.0
    %87 = vmatpush1.msra.mxu0 0.0
    %88 = vmatprep.subr.mxu0 0.0
    %89 = vmatpush1.msra.mxu0 0.0
    %90 = vmatprep.subr.mxu0 0.0
    %91 = vmatpush1.msra.mxu0 0.0
    %92 = vmatprep.mubr.f32.mxu0 0.0
    %93 = vmatmul.mubr.f32.gmra.mrb[0].mxu0 %v22
    %v94 = vpop.f32.mrb[0].mxu0
    %v95 = vadd.f32 0.0, %v94
    %v96 = vpop.f32.mrb[0].mxu0
    %97 = vdwg.mxu0
    %v98 = vmax.f32 %v95, 0.0
    %v99 = vld [vmem:[%s2] sm:$0x3]
    %v100 = vld [vmem:[%s3] sm:$0x1]
    %v102 = vlaneseq
    %v103 = vshrl.u32 %v102, 7
    %v104 = vsub.s32 0, %v103
    %v105 = vrot.slane %v100, %v104
    %vm107 = vcmask 15360
    %v109 = vsel %vm107, %v98, 0
    %vm111 = vcmask 1041408
    %v113 = vsel %vm111, %v99, 0
    %115 = vmatprep.subr.mxu0 0.0
    %116 = vmatpush1.msra.mxu0 %v113
    %117 = vmatprep.subr.mxu0 0.0
    %118 = vmatpush1.msra.mxu0 0.0
    %119 = vmatprep.subr.mxu0 0.0
    %120 = vmatpush1.msra.mxu0 0.0
    %121 = vmatprep.subr.mxu0 0.0
    %122 = vmatpush1.msra.mxu0 0.0
    %123 = vmatprep.subr.mxu0 0.0
    %124 = vmatpush1.msra.mxu0 0.0
    %125 = vmatprep.subr.mxu0 0.0
    %126 = vmatpush1.msra.mxu0 0.0
    %127 = vmatprep.subr.mxu0 0.0
    %128 = vmatpush1.msra.mxu0 0.0
    %129 = vmatprep.subr.mxu0 0.0
    %130 = vmatpush1.msra.mxu0 0.0
    %131 = vmatprep.subr.mxu0 0.0
    %132 = vmatpush1.msra.mxu0 0.0
    %133 = vmatprep.subr.mxu0 0.0
    %134 = vmatpush1.msra.mxu0 0.0
    %135 = vmatprep.subr.mxu0 0.0
    %136 = vmatpush1.msra.mxu0 0.0
    %137 = vmatprep.subr.mxu0 0.0
    %138 = vmatpush1.msra.mxu0 0.0
    %139 = vmatprep.subr.mxu0 0.0
    %140 = vmatpush1.msra.mxu0 0.0
    %141 = vmatprep.subr.mxu0 0.0
    %142 = vmatpush1.msra.mxu0 0.0
    %143 = vmatprep.subr.mxu0 0.0
    %144 = vmatpush1.msra.mxu0 0.0
    %145 = vmatprep.subr.mxu0 0.0
    %146 = vmatpush1.msra.mxu0 0.0
    %147 = vmatprep.subr.mxu0 0.0
    %148 = vmatpush1.msra.mxu0 0.0
    %149 = vmatprep.subr.mxu0 0.0
    %150 = vmatpush1.msra.mxu0 0.0
    %151 = vmatprep.subr.mxu0 0.0
    %152 = vmatpush1.msra.mxu0 0.0
    %153 = vmatprep.subr.mxu0 0.0
    %154 = vmatpush1.msra.mxu0 0.0
    %155 = vmatprep.subr.mxu0 0.0
    %156 = vmatpush1.msra.mxu0 0.0
    %157 = vmatprep.subr.mxu0 0.0
    %158 = vmatpush1.msra.mxu0 0.0
    %159 = vmatprep.subr.mxu0 0.0
    %160 = vmatpush1.msra.mxu0 0.0
    %161 = vmatprep.subr.mxu0 0.0
    %162 = vmatpush1.msra.mxu0 0.0
    %163 = vmatprep.subr.mxu0 0.0
    %164 = vmatpush1.msra.mxu0 0.0
    %165 = vmatprep.subr.mxu0 0.0
    %166 = vmatpush1.msra.mxu0 0.0
    %167 = vmatprep.subr.mxu0 0.0
    %168 = vmatpush1.msra.mxu0 0.0
    %169 = vmatprep.subr.mxu0 0.0
    %170 = vmatpush1.msra.mxu0 0.0
    %171 = vmatprep.subr.mxu0 0.0
    %172 = vmatpush1.msra.mxu0 0.0
    %173 = vmatprep.subr.mxu0 0.0
    %174 = vmatpush1.msra.mxu0 0.0
    %175 = vmatprep.subr.mxu0 0.0
    %176 = vmatpush1.msra.mxu0 0.0
    %177 = vmatprep.subr.mxu0 0.0
    %178 = vmatpush1.msra.mxu0 0.0
    %179 = vmatprep.mubr.f32.mxu0 0.0
    %180 = vmatmul.mubr.f32.gmra.mrb[0].mxu0 %v109
    %v181 = vpop.f32.mrb[0].mxu0
    %v182 = vadd.f32 %v105, %v181
    %v183 = vpop.f32.mrb[0].mxu0
    %184 = vdwg.mxu0
    %v185 = vmul.f32 %v182, 0.033333335
    %vm186 = vcmask 25600
    %v187 = vsel %vm186, %v185, -inf
    %188 = vmax.xlane.f32.xlu0 %v187
    %v189 = vpop.xlane.xlu0 %188
    %v190 = vsub.f32 %v185, %v189
    %v191 = vmul.f32 %v190, 1.442695
    %v192 = vpow.pop %v191
    %v193 = vsel %vm186, %v192, 0.0
    %194 = vadd.xlane.f32.xlu0 %v193
    %v195 = vpop.xlane.xlu0 %194
    %v196 = vrcp.pop %v195
    %v197 = vmul.f32 %v192, %v196
    %198 = vst.msk [vmem:[#allocation2] sm:$0x3] %vm186, %v197
    // Predicated region
    $region18: #{tpu_custom_call.1} parent=1 // pred_check
      _
    $region19: #{tpu_custom_call.1} parent=1 // pred_check_branch
      %200 = sbr.rel (0) target = $region21
    $region20: #{tpu_custom_call.1} parent=1 // pred_region
      %s202 = ssub.s32 32, 32
      %203 = vsyncadd [#allocation3], %s202
      %s205 = sshll.u32 [#allocation2], 4
      %s206 = int_to_ptr.vmem [resolvable:$true] %s205
      %208 = dma.vmem_to_hbm [thread:$0]  %s206, 32, %s4, [#allocation3]
    $region21: #{tpu_custom_call.1} parent=1 // pred_fallthru
      _
    // Predicated region
    $region22: #{tpu_custom_call.1} parent=1 // pred_check
      _
    $region23: #{tpu_custom_call.1} parent=1 // pred_check_branch
      %210 = sbr.rel (0) target = $region25
    $region24: #{tpu_custom_call.1} parent=1 // pred_region
      %211 = dma.done [#allocation3], 32
    $region25: #{tpu_custom_call.1} parent=1 // pred_fallthru
      _
    %212 = vsyncpa [#allocation3], 1

</llo_original>
